<compile_context>
chip_gen: v7x
topology: tpu7x:2x2x1
jax: 0.10.0
libtpu: 0.0.40
codegen_flags: <defaults>
</compile_context>

<pallas_src>
import functools

import jax
import jax.numpy as jnp
from jax.experimental import pallas as pl
from jax.experimental.pallas import tpu as pltpu


# --------------------------------------------------------------------------- #
# Kernel
# --------------------------------------------------------------------------- #
def _luong_attention_kernel(q_ref, enc_ref, out_ref, m_out_ref, l_out_ref,
                            m_scr, l_scr, *, fused_softmax):
    """Grid = (batch blocks, S blocks); the S (softmax reduction) axis is last.

    q_ref   : (TB, H)      q = hidden[-1] @ W, precomputed in the wrapper
    enc_ref : (TB, TS, H)  encoder_outputs tile
    out_ref : (TB, TS)     softmax probs (fused) or unnormalized exp tile
    m_out   : (1, TB, 1)   running row-max after this S tile
    l_out   : (1, TB, 1)   running row-sum after this S tile
    m_scr/l_scr : (TB, 1)  online-softmax state carried across S tiles
    """
    j = pl.program_id(1)

    @pl.when(j == 0)
    def _init():
        m_scr[...] = jnp.full(m_scr.shape, -jnp.inf, m_scr.dtype)
        l_scr[...] = jnp.zeros(l_scr.shape, l_scr.dtype)

    q = q_ref[...]                                     # (TB, H)
    enc = enc_ref[...]                                 # (TB, TS, H)

    # score[b, s] = enc[b, s, :] . q[b, :]   (lane-axis reduce over H; hides under
    # the enc DMA since the kernel is HBM-bandwidth bound).
    score = jnp.sum(enc * q[:, None, :], axis=-1)      # (TB, TS)

    # Online softmax across S tiles (degenerates to a plain softmax when ns == 1).
    m_prev = m_scr[...]
    m_new = jnp.maximum(m_prev, jnp.max(score, axis=-1, keepdims=True))
    e = jnp.exp(score - m_new)                         # (TB, TS)
    l_new = (jnp.exp(m_prev - m_new) * l_scr[...]
             + jnp.sum(e, axis=-1, keepdims=True))
    m_scr[...] = m_new
    l_scr[...] = l_new
    m_out_ref[...] = m_new[None]                       # (1, TB, 1)
    l_out_ref[...] = l_new[None]

    if fused_softmax:
        # Single S tile per row: finish the softmax in-kernel (no epilogue pass).
        out_ref[...] = e * pl.reciprocal(l_new, approx=False)   # exact reciprocal
    else:
        # S-tiled path: emit unnormalized exp; the wrapper epilogue rescales each
        # tile to the global max and divides by the global sum.
        out_ref[...] = e


# --------------------------------------------------------------------------- #
# Tiling / VMEM budgeting
# --------------------------------------------------------------------------- #
def _round_up(x, m):
    return -(-x // m) * m


def _vmem_budget_bytes():
    """(working-set budget, vmem_limit_bytes) for this TPU generation.

    Physical VMEM per TensorCore: 128 MiB on v5e/v6e, 64 MiB on v7x; the default
    *scoped* limit is only 16/32/32 MiB, so raise vmem_limit_bytes explicitly and
    size the double-buffered working set to ~70% of physical.
    """
    phys = None
    try:
        phys = int(getattr(pltpu.get_tpu_info(), "vmem_capacity_bytes", 0)) or None
    except Exception:
        phys = None
    if phys is None:
        phys = 64 * 1024 * 1024                        # conservative fallback (v7x)
    budget = int(phys * 0.70)
    vmem_limit = min(phys, budget + 16 * 1024 * 1024)
    return budget, vmem_limit


def _pick_tiling(B, S, H, budget_bytes):
    """Largest tiles that fit the VMEM budget while keeping >= ~8 batch grid steps
    (DMA/compute overlap + both TensorCores on v7x)."""
    f32 = 4

    def working_set(bb, bs):
        # double-buffered enc tile + q rows + output tile + tiny running stats
        return (2 * bb * bs * H + 2 * bb * H + 2 * bb * bs + 8 * bb) * f32

    if B <= 8:
        bb = B                                         # block dim == full dim is legal
    else:
        bb = min(_round_up(B, 8), max(8, _round_up(B // 8, 8)))   # ~B/8 rows / block
        while bb > 8 and working_set(bb, S) > budget_bytes:
            bb = max(8, (bb // 2 // 8) * 8)

    bs = S
    if working_set(bb, S) > budget_bytes:
        # Large-S fallback: tile the softmax axis.  block_s must divide S and be a
        # multiple of 128 so output tiles stay lane-dense.
        divisors = [d for d in range(128, S, 128) if S % d == 0]
        fitting = [d for d in divisors if working_set(bb, d) <= budget_bytes]
        if fitting:
            bs = max(fitting)
        elif divisors:
            bs = min(divisors)
        # TODO(synk): masked edge S-tile to cover S % 128 != 0 at very large S*H.
    return bb, bs


# --------------------------------------------------------------------------- #
# Wrapper
# --------------------------------------------------------------------------- #
def luong_attention(hidden, encoder_outputs, w_attn, b_attn, *,
                    block_b=None, block_s=None):
    """softmax(bmm(Linear(encoder_outputs), hidden[-1].unsqueeze(2)), dim=1) -> (B, S)."""
    h_last = hidden[-1]                                # (B, H)
    B, S, H = encoder_outputs.shape
    assert h_last.shape == (B, H)
    assert w_attn.shape == (H, H) and b_attn.shape == (H,)

    # Fold nn.Linear into the query once, in plain XLA (torch (out,in) layout).
    # The bias adds a per-row constant (b . h) to the scores -> cancels in softmax.
    q = jnp.dot(h_last, w_attn, precision=jax.lax.Precision.HIGHEST,
                preferred_element_type=jnp.float32)

    budget, vmem_limit = _vmem_budget_bytes()
    auto_bb, auto_bs = _pick_tiling(B, S, H, budget)
    bb = auto_bb if block_b is None else block_b
    bs = auto_bs if block_s is None else block_s
    assert bb == B or bb % 8 == 0, "block_b must be a multiple of 8 (or == B)"
    assert bs == S or (S % bs == 0 and bs % 128 == 0), \
        "block_s must divide S and be a multiple of 128 (or == S)"

    nb = pl.cdiv(B, bb)           # ragged last batch block: no jnp.pad, Pallas masks it
    ns = max(1, S // bs)
    fused = ns == 1

    kernel = functools.partial(_luong_attention_kernel, fused_softmax=fused)

    out_raw, m_run, l_run = pl.pallas_call(
        kernel,
        out_shape=(
            jax.ShapeDtypeStruct((B, S), jnp.float32),        # probs / exp tiles
            jax.ShapeDtypeStruct((ns, B, 1), jnp.float32),    # running max per S tile
            jax.ShapeDtypeStruct((ns, B, 1), jnp.float32),    # running sum per S tile
        ),
        grid=(nb, ns),                                 # softmax reduction axis last
        in_specs=[
            pl.BlockSpec((bb, H), lambda i, j: (i, 0)),
            pl.BlockSpec((bb, bs, H), lambda i, j: (i, j, 0)),
        ],
        out_specs=(
            pl.BlockSpec((bb, bs), lambda i, j: (i, j)),
            pl.BlockSpec((1, bb, 1), lambda i, j: (j, i, 0)),
            pl.BlockSpec((1, bb, 1), lambda i, j: (j, i, 0)),
        ),
        scratch_shapes=[
            pltpu.VMEM((bb, 1), jnp.float32),          # running max state
            pltpu.VMEM((bb, 1), jnp.float32),          # running sum state
        ],
        compiler_params=pltpu.CompilerParams(
            dimension_semantics=("parallel", "arbitrary"),
            vmem_limit_bytes=vmem_limit,
        ),
    )(q, encoder_outputs)

    if fused:
        return out_raw

    # Epilogue for the S-tiled path: rescale each tile from its running max to the
    # global max and normalize.  Touches only (B, S)-sized data (~1/H of the enc
    # HBM traffic), so it is negligible at the shapes that require S tiling.
    m_final = m_run[-1]                                # (B, 1)
    l_final = l_run[-1]                                # (B, 1)
    tile_scale = jnp.exp(m_run - m_final[None]) / l_final[None]     # (ns, B, 1)
    out = out_raw.reshape(B, ns, bs) * jnp.transpose(tile_scale, (1, 0, 2))
    return out.reshape(B, S)


# --------------------------------------------------------------------------- #
# Reference + tests
# --------------------------------------------------------------------------- #
def _reference(hidden, encoder_outputs, w_attn, b_attn):
    energy = jnp.einsum("bsh,oh->bso", encoder_outputs, w_attn,
                        precision=jax.lax.Precision.HIGHEST) + b_attn
    score = jnp.einsum("bso,bo->bs", energy, hidden[-1],
                       precision=jax.lax.Precision.HIGHEST)
    return jax.nn.softmax(score, axis=1)


if __name__ == "__main__":
    key = jax.random.PRNGKey(0)

    # --- spec-sized smoke test (B=2, S=8, H=32): single-tile fused softmax path ---
    L, B, S, H = 1, 2, 8, 32
    k1, k2, k3, k4, k5 = jax.random.split(key, 5)
    hidden = jax.random.normal(k1, (L, B, H), jnp.float32)
    enc = jax.random.normal(k2, (B, S, H), jnp.float32)
    bound = 1.0 / (H ** 0.5)
    w = jax.random.uniform(k3, (H, H), jnp.float32, minval=-bound, maxval=bound)
    b = jax.random.uniform(k4, (H,), jnp.float32, minval=-bound, maxval=bound)

    out = luong_attention(hidden, enc, w, b)
    jax.block_until_ready(out)
    ref = _reference(hidden, enc, w, b)
    assert out.shape == (B, S)
    assert jnp.allclose(jnp.sum(out, axis=1), 1.0, atol=1e-5)
    assert jnp.allclose(out, ref, atol=1e-5, rtol=1e-4), "fused path mismatch"

    # --- tiled paths: multi-block ragged batch (no wrapper pad) + S tiling with the
    #     online-softmax kernel and wrapper-side rescale epilogue -------------------
    L2, B2, S2, H2 = 1, 20, 256, 128
    k6, k7, k8, k9, _ = jax.random.split(k5, 5)
    hidden2 = jax.random.normal(k6, (L2, B2, H2), jnp.float32)
    enc2 = jax.random.normal(k7, (B2, S2, H2), jnp.float32)
    bound2 = 1.0 / (H2 ** 0.5)
    w2 = jax.random.uniform(k8, (H2, H2), jnp.float32, minval=-bound2, maxval=bound2)
    b2 = jax.random.uniform(k9, (H2,), jnp.float32, minval=-bound2, maxval=bound2)

    out2 = luong_attention(hidden2, enc2, w2, b2, block_b=8, block_s=128)
    jax.block_until_ready(out2)
    ref2 = _reference(hidden2, enc2, w2, b2)
    assert out2.shape == (B2, S2)
    assert jnp.allclose(jnp.sum(out2, axis=1), 1.0, atol=1e-4)
    assert jnp.allclose(out2, ref2, atol=1e-4, rtol=1e-3), "tiled path mismatch"

    print("KERNEL_OK")
</pallas_src>

<mosaic_0001>
module attributes {stable_mosaic.version = 11 : i64} {
  func.func @_luong_attention_kernel(%arg0: i32, %arg1: i32, %arg2: memref<2x32xf32, #tpu.memory_space<vmem>>, %arg3: memref<2x8x32xf32, #tpu.memory_space<vmem>>, %arg4: memref<2x8xf32, #tpu.memory_space<vmem>>, %arg5: memref<1x2x1xf32, #tpu.memory_space<vmem>>, %arg6: memref<1x2x1xf32, #tpu.memory_space<vmem>>, %arg7: memref<2x1xf32, #tpu.memory_space<vmem>>, %arg8: memref<2x1xf32, #tpu.memory_space<vmem>>) attributes {dimension_semantics = [#tpu.dimension_semantics<parallel>, #tpu.dimension_semantics<arbitrary>], iteration_bounds = array<i64: 1, 1>, scalar_prefetch = 0 : i64, scratch_operands = 2 : i64, tpu.core_type = #tpu.core_type<tc>, window_params = [{transform_indices = @transform_0, window_bounds = array<i64: 2, 32>}, {transform_indices = @transform_1, window_bounds = array<i64: 2, 8, 32>}, {transform_indices = @transform_2, window_bounds = array<i64: 2, 8>}, {transform_indices = @transform_3, window_bounds = array<i64: 1, 2, 1>}, {transform_indices = @transform_4, window_bounds = array<i64: 1, 2, 1>}]} {
    %c0_i32 = arith.constant 0 : i32
    %0 = arith.cmpi eq, %arg1, %c0_i32 : i32
    %1 = arith.extui %0 : i1 to i32
    %c0_i32_0 = arith.constant 0 : i32
    %2 = arith.cmpi ne, %1, %c0_i32_0 : i32
    scf.if %2 {
      %cst_23 = arith.constant 0xFF800000 : f32
      %33 = vector.broadcast %cst_23 : f32 to vector<2x1xf32>
      %c0_24 = arith.constant 0 : index
      %c0_25 = arith.constant 0 : index
      %34 = vector.load %arg7[%c0_24, %c0_25] : memref<2x1xf32, #tpu.memory_space<vmem>>, vector<2x1xf32>
      tpu.vector_store %arg7[%c0_24, %c0_25], %33 {strides = array<i32>} : memref<2x1xf32, #tpu.memory_space<vmem>>, vector<2x1xf32>,
      %cst_26 = arith.constant 0.000000e+00 : f32
      %35 = vector.broadcast %cst_26 : f32 to vector<2x1xf32>
      %c0_27 = arith.constant 0 : index
      %c0_28 = arith.constant 0 : index
      %36 = vector.load %arg8[%c0_27, %c0_28] : memref<2x1xf32, #tpu.memory_space<vmem>>, vector<2x1xf32>
      tpu.vector_store %arg8[%c0_27, %c0_28], %35 {strides = array<i32>} : memref<2x1xf32, #tpu.memory_space<vmem>>, vector<2x1xf32>,
    } else {
    }
    %c0 = arith.constant 0 : index
    %c0_1 = arith.constant 0 : index
    %3 = vector.load %arg2[%c0, %c0_1] : memref<2x32xf32, #tpu.memory_space<vmem>>, vector<2x32xf32>
    %c0_2 = arith.constant 0 : index
    %c0_3 = arith.constant 0 : index
    %c0_4 = arith.constant 0 : index
    %4 = vector.load %arg3[%c0_2, %c0_3, %c0_4] : memref<2x8x32xf32, #tpu.memory_space<vmem>>, vector<2x8x32xf32>
    %5 = vector.shape_cast %3 : vector<2x32xf32> to vector<2x1x32xf32>
    %6 = vector.broadcast %5 : vector<2x1x32xf32> to vector<2x8x32xf32>
    %7 = arith.mulf %4, %6 : vector<2x8x32xf32>
    %cst = arith.constant dense<0.000000e+00> : vector<2x8xf32>
    %8 = vector.multi_reduction <add>, %7, %cst [2] : vector<2x8x32xf32> to vector<2x8xf32>
    %c0_5 = arith.constant 0 : index
    %c0_6 = arith.constant 0 : index
    %9 = vector.load %arg7[%c0_5, %c0_6] : memref<2x1xf32, #tpu.memory_space<vmem>>, vector<2x1xf32>
    %cst_7 = arith.constant dense<0xFF800000> : vector<2xf32>
    %10 = vector.multi_reduction <maximumf>, %8, %cst_7 [1] : vector<2x8xf32> to vector<2xf32>
    %11 = vector.shape_cast %10 : vector<2xf32> to vector<2x1xf32>
    %12 = arith.maximumf %9, %11 : vector<2x1xf32>
    %13 = vector.broadcast %12 : vector<2x1xf32> to vector<2x8xf32>
    %14 = arith.subf %8, %13 : vector<2x8xf32>
    %15 = math.exp %14 : vector<2x8xf32>
    %16 = arith.subf %9, %12 : vector<2x1xf32>
    %17 = math.exp %16 : vector<2x1xf32>
    %c0_8 = arith.constant 0 : index
    %c0_9 = arith.constant 0 : index
    %18 = vector.load %arg8[%c0_8, %c0_9] : memref<2x1xf32, #tpu.memory_space<vmem>>, vector<2x1xf32>
    %19 = arith.mulf %17, %18 : vector<2x1xf32>
    %cst_10 = arith.constant dense<0.000000e+00> : vector<2xf32>
    %20 = vector.multi_reduction <add>, %15, %cst_10 [1] : vector<2x8xf32> to vector<2xf32>
    %21 = vector.shape_cast %20 : vector<2xf32> to vector<2x1xf32>
    %22 = arith.addf %19, %21 : vector<2x1xf32>
    %c0_11 = arith.constant 0 : index
    %c0_12 = arith.constant 0 : index
    %23 = vector.load %arg7[%c0_11, %c0_12] : memref<2x1xf32, #tpu.memory_space<vmem>>, vector<2x1xf32>
    tpu.vector_store %arg7[%c0_11, %c0_12], %12 {strides = array<i32>} : memref<2x1xf32, #tpu.memory_space<vmem>>, vector<2x1xf32>,
    %c0_13 = arith.constant 0 : index
    %c0_14 = arith.constant 0 : index
    %24 = vector.load %arg8[%c0_13, %c0_14] : memref<2x1xf32, #tpu.memory_space<vmem>>, vector<2x1xf32>
    tpu.vector_store %arg8[%c0_13, %c0_14], %22 {strides = array<i32>} : memref<2x1xf32, #tpu.memory_space<vmem>>, vector<2x1xf32>,
    %25 = vector.shape_cast %12 : vector<2x1xf32> to vector<1x2x1xf32>
    %c0_15 = arith.constant 0 : index
    %c0_16 = arith.constant 0 : index
    %c0_17 = arith.constant 0 : index
    %26 = vector.load %arg5[%c0_15, %c0_16, %c0_17] : memref<1x2x1xf32, #tpu.memory_space<vmem>>, vector<1x2x1xf32>
    tpu.vector_store %arg5[%c0_15, %c0_16, %c0_17], %25 {strides = array<i32>} : memref<1x2x1xf32, #tpu.memory_space<vmem>>, vector<1x2x1xf32>,
    %27 = vector.shape_cast %22 : vector<2x1xf32> to vector<1x2x1xf32>
    %c0_18 = arith.constant 0 : index
    %c0_19 = arith.constant 0 : index
    %c0_20 = arith.constant 0 : index
    %28 = vector.load %arg6[%c0_18, %c0_19, %c0_20] : memref<1x2x1xf32, #tpu.memory_space<vmem>>, vector<1x2x1xf32>
    tpu.vector_store %arg6[%c0_18, %c0_19, %c0_20], %27 {strides = array<i32>} : memref<1x2x1xf32, #tpu.memory_space<vmem>>, vector<1x2x1xf32>,
    %29 = tpu.reciprocal %22 : vector<2x1xf32> -> vector<2x1xf32>
    %30 = vector.broadcast %29 : vector<2x1xf32> to vector<2x8xf32>
    %31 = arith.mulf %15, %30 : vector<2x8xf32>
    %c0_21 = arith.constant 0 : index
    %c0_22 = arith.constant 0 : index
    %32 = vector.load %arg4[%c0_21, %c0_22] : memref<2x8xf32, #tpu.memory_space<vmem>>, vector<2x8xf32>
    tpu.vector_store %arg4[%c0_21, %c0_22], %31 {strides = array<i32>} : memref<2x8xf32, #tpu.memory_space<vmem>>, vector<2x8xf32>,
    return
  }
  func.func @transform_0(%arg0: i32, %arg1: i32) -> (i32, i32) {
    %c0_i32 = arith.constant 0 : i32
    %c0_i32_0 = arith.constant 0 : i32
    return %arg0, %c0_i32 : i32, i32
  }
  func.func @transform_1(%arg0: i32, %arg1: i32) -> (i32, i32, i32) {
    %c0_i32 = arith.constant 0 : i32
    %c0_i32_0 = arith.constant 0 : i32
    return %arg0, %arg1, %c0_i32 : i32, i32, i32
  }
  func.func @transform_2(%arg0: i32, %arg1: i32) -> (i32, i32) {
    %c0_i32 = arith.constant 0 : i32
    return %arg0, %arg1 : i32, i32
  }
  func.func @transform_3(%arg0: i32, %arg1: i32) -> (i32, i32, i32) {
    %c0_i32 = arith.constant 0 : i32
    %c0_i32_0 = arith.constant 0 : i32
    return %arg1, %arg0, %c0_i32 : i32, i32, i32
  }
  func.func @transform_4(%arg0: i32, %arg1: i32) -> (i32, i32, i32) {
    %c0_i32 = arith.constant 0 : i32
    %c0_i32_0 = arith.constant 0 : i32
    return %arg1, %arg0, %c0_i32 : i32, i32, i32
  }
}

</mosaic_0001>

<llo_original>
// kernel: tpu_custom_call.1
$region0: #{tpu_custom_call.1}
  #allocation0 [shape = 'u32[]', space=smem, size = 0x4, offset = 0x4, fixed_abs, tag = 'smem constant byte address 0x4 - core index']
  #allocation1 [shape = 'u32[144,128]{1,0:T(1,128)}', space=vmem, size = 0x12000, scoped, tag = 'internal scratch']
  #allocation2 [shape = 'f32[2,1]{1,0:T(2,128)}', space=vmem, size = 0x400, scoped, tag = 'scratch operand']
  #allocation3 [shape = 'f32[2,1]{1,0:T(2,128)}', space=vmem, size = 0x400, scoped, tag = 'scratch operand']
  %s0 = inlined_call_operand.hbm [shape: f32[2,32], index: 0, kind: input, shape index: {}]
  %s1 = inlined_call_operand.hbm [shape: f32[2,8,32], index: 1, kind: input, shape index: {}]
  %s2 = inlined_call_operand.hbm [shape: f32[2,8], index: 2, kind: output, shape index: {0}]
  %s3 = inlined_call_operand.vmem [shape: f32[1,2,1], index: 3, kind: output, shape index: {1}]
  %s4 = inlined_call_operand.vmem [shape: f32[1,2,1], index: 4, kind: output, shape index: {2}]
  %5 = xla_tuple %s2, %s3, %s4
  %s6 = sld [smem:[#allocation0]]
  $region46: #{tpu_custom_call.1} parent=0
    _
  %s8 = ssub.s32 1, %s6
  %s9 = scalar_select 0, %s8, %s6
  $region1: #{tpu_custom_call.1} parent=0
    #allocation4 [shape = 'u8[1024]{0}', space=vmem, size = 0x400, scoped, tag = 'input window, operand 0, single buffered']
    #allocation5 [shape = 's32[1]{0}', space=sflag, size = 0x4, scoped, tag = 'scoped memory for tpu_custom_call.1']
    #allocation6 [shape = 's32[1]{0}', space=sflag, size = 0x4, scoped, tag = 'scoped memory for tpu_custom_call.1']
    #allocation7 [shape = 'u8[8192]{0}', space=vmem, size = 0x2000, scoped, tag = 'input window, operand 1, single buffered']
    #allocation8 [shape = 's32[1]{0}', space=sflag, size = 0x4, scoped, tag = 'scoped memory for tpu_custom_call.1']
    #allocation9 [shape = 'u8[1024]{0}', space=vmem, size = 0x400, scoped, tag = 'output window, operand 0, single buffered']
    %10 = vsyncpa [#allocation5], 0
    %11 = vsyncpa [#allocation8], 0
    %12 = vsyncpa [#allocation6], 0
    // Predicated region
    $region2: #{tpu_custom_call.1} parent=1 // pred_check
      _
    $region3: #{tpu_custom_call.1} parent=1 // pred_check_branch
      %14 = sbr.rel (0) target = $region5
    $region4: #{tpu_custom_call.1} parent=1 // pred_region
      %s16 = ssub.s32 32, 32
      %17 = vsyncadd [#allocation5], %s16
      %s19 = sshll.u32 [#allocation4], 4
      %s20 = int_to_ptr.vmem [resolvable:$true] %s19
      %22 = dma.hbm_to_vmem [thread:$0]  %s0, 32, %s20, [#allocation5]
    $region5: #{tpu_custom_call.1} parent=1 // pred_fallthru
      _
    // Predicated region
    $region6: #{tpu_custom_call.1} parent=1 // pred_check
      _
    $region7: #{tpu_custom_call.1} parent=1 // pred_check_branch
      %24 = sbr.rel (0) target = $region9
    $region8: #{tpu_custom_call.1} parent=1 // pred_region
      %s26 = ssub.s32 256, 256
      %27 = vsyncadd [#allocation8], %s26
      %s28 = sshll.u32 [#allocation7], 4
      %s29 = int_to_ptr.vmem [resolvable:$true] %s28
      %34 = dma.hbm_to_vmem [thread:$0]  %s1, 256, %s29, [#allocation8], 128, 128, 8
    $region9: #{tpu_custom_call.1} parent=1 // pred_fallthru
      _
    // Predicated region
    $region10: #{tpu_custom_call.1} parent=1 // pred_check
      _
    $region11: #{tpu_custom_call.1} parent=1 // pred_check_branch
      %36 = sbr.rel (0) target = $region13
    $region12: #{tpu_custom_call.1} parent=1 // pred_region
      %37 = dma.done [#allocation5], 32
    $region13: #{tpu_custom_call.1} parent=1 // pred_fallthru
      _
    // Predicated region
    $region14: #{tpu_custom_call.1} parent=1 // pred_check
      _
    $region15: #{tpu_custom_call.1} parent=1 // pred_check_branch
      %39 = sbr.rel (0) target = $region17
    $region16: #{tpu_custom_call.1} parent=1 // pred_region
      %40 = dma.done [#allocation8], 256
    $region17: #{tpu_custom_call.1} parent=1 // pred_fallthru
      _
    %p41 = scmp.eq.s32.totalorder 0, 0
    // Predicated region
    $region18: #{tpu_custom_call.1} parent=1 // pred_check
      %p42 = pneg %p41
    $region19: #{tpu_custom_call.1} parent=1 // pred_check_branch
      %44 = sbr.rel (%p42) target = $region21
    $region20: #{tpu_custom_call.1} parent=1 // pred_region
      %vm45 = vcmask 1024
      %46 = vst.msk [vmem:[#allocation2] sm:$0x3] %vm45, -inf
      %47 = vst.msk [vmem:[#allocation3] sm:$0x3] %vm45, 0.0
    $region21: #{tpu_custom_call.1} parent=1 // pred_fallthru
      _
    %v48 = vld [vmem:[#allocation4] sm:$0x3]
    %v49 = vld [vmem:[#allocation7] sm:$0xff]
    %v50 = vld [vmem:[#allocation7 + $0x8] sm:$0xff]
    %v53 = vunpack.c.l.s4 1966171168
    %v54 = vunpack.c.0.s8 %v53
    %v55 = vlaneseq
    %v56 = vshrl.u32 %v55, 7
    %v57 = vsub.s32 %v54, %v56
    %v58 = vrot.slane %v48, %v57
    %v59 = vcombine.high %v58, %v58
    %v61 = vunpack.c.l.s4 1966171168
    %v62 = vunpack.c.0.s8 %v61
    %v63 = vlaneseq
    %v64 = vshrl.u32 %v63, 7
    %v65 = vsub.s32 %v62, %v64
    %v66 = vrot.slane %v58, %v65
    %v68 = vunpack.c.l.s4 1966171168
    %v69 = vunpack.c.0.s8 %v68
    %v70 = vlaneseq
    %v71 = vshrl.u32 %v70, 7
    %v72 = vsub.s32 %v69, %v71
    %v73 = vrot.slane %v59, %v72
    %v74 = vlaneseq
    %v75 = vshrl.u32 %v74, 7
    %v76 = vsub.s32 0, %v75
    %v77 = vrot.slane %v66, %v76
    %v78 = vlaneseq
    %v79 = vshrl.u32 %v78, 7
    %v80 = vsub.s32 0, %v79
    %v81 = vrot.slane %v73, %v80
    %v84 = vmul.f32 %v49, %v77
    %v85 = vmul.f32 %v50, %v81
    %vm86 = vcmask 261120
    %v87 = vsel %vm86, %v84, 0.0
    %88 = vadd.xlane.f32.xlu0 %v87
    %v89 = vpop.xlane.xlu0 %88
    %v90 = vsel %vm86, %v85, 0.0
    %91 = vadd.xlane.f32.xlu0 %v90
    %v92 = vpop.xlane.xlu0 %91
    %v93 = vld [vmem:[#allocation2] sm:$0x3]
    %v96 = vlaneseq
    %v97 = vand.u32 %v96, 127
    %v98 = vlaneseq
    %v99 = vshrl.u32 %v98, 7
    %v100 = vsub.s32 %v97, %v99
    %v101 = vrot.slane %v89, %v100
    %v102 = vlaneseq
    %v103 = vshrl.u32 %v102, 7
    %v104 = vsub.s32 %v97, %v103
    %v105 = vrot.slane %v92, %v104
    %vm106 = vcmask 1041409
    %v107 = vsel %vm106, %v105, %v101
    %vm109 = vcmask 58368
    %v110 = vsel %vm109, %v107, -inf
    %111 = vmax.xlane.f32.xlu0 %v110
    %v112 = vpop.xlane.xlu0 %111
    %v113 = vmax.f32 %v93, %v112
    %115 = vset.pattern.permute.xlu0 0
    %116 = vperm.xlu0 %115, %v113
    %v117 = vpop.permute.xlu0 %116
    %v118 = vlaneseq
    %v119 = vshrl.u32 %v118, 7
    %v120 = vsub.s32 0, %v119
    %v121 = vrot.slane %v117, %v120
    %v122 = vlaneseq
    %v123 = vshrl.u32 %v122, 7
    %v124 = vsub.s32 1, %v123
    %v125 = vrot.slane %v117, %v124
    %v128 = vsub.f32 %v89, %v121
    %v129 = vsub.f32 %v92, %v125
    %v130 = vmul.f32 %v128, 1.442695
    %v131 = vpow.pop %v130
    %v132 = vmul.f32 %v129, 1.442695
    %v133 = vpow.pop %v132
    %v134 = vsub.f32 %v93, %v113
    %v135 = vmul.f32 %v134, 1.442695
    %v136 = vpow.pop %v135
    %v137 = vld [vmem:[#allocation3] sm:$0x3]
    %v138 = vmul.f32 %v136, %v137
    %141 = vset.pattern.permute.xlu0 0
    %142 = vperm.xlu0 %141, %v131
    %v143 = vpop.permute.xlu0 %142
    %144 = vset.pattern.permute.xlu0 0
    %145 = vperm.xlu0 %144, %v133
    %v146 = vpop.permute.xlu0 %145
    %v147 = vlaneseq
    %v148 = vshrl.u32 %v147, 7
    %v149 = vsub.s32 %v97, %v148
    %v150 = vrot.slane %v143, %v149
    %v151 = vlaneseq
    %v152 = vshrl.u32 %v151, 7
    %v153 = vsub.s32 %v97, %v152
    %v154 = vrot.slane %v146, %v153
    %v155 = vsel %vm106, %v154, %v150
    %v157 = vsel %vm109, %v155, 0.0
    %158 = vadd.xlane.f32.xlu0 %v157
    %v159 = vpop.xlane.xlu0 %158
    %v160 = vadd.f32 %v138, %v159
    %vm161 = vcmask 1024
    %162 = vst.msk [vmem:[#allocation2] sm:$0x3] %vm161, %v113
    %163 = vst.msk [vmem:[#allocation3] sm:$0x3] %vm161, %v160
    %164 = vst.msk [vmem:[%s3] sm:$0x3] %vm161, %v113
    %165 = vst.msk [vmem:[%s4] sm:$0x3] %vm161, %v160
    %v166 = vrcp.pop %v160
    %168 = vset.pattern.permute.xlu0 0
    %169 = vperm.xlu0 %168, %v166
    %v170 = vpop.permute.xlu0 %169
    %v171 = vlaneseq
    %v172 = vshrl.u32 %v171, 7
    %v173 = vsub.s32 0, %v172
    %v174 = vrot.slane %v170, %v173
    %v175 = vlaneseq
    %v176 = vshrl.u32 %v175, 7
    %v177 = vsub.s32 1, %v176
    %v178 = vrot.slane %v170, %v177
    %v181 = vmul.f32 %v131, %v174
    %v182 = vmul.f32 %v133, %v178
    %185 = vset.pattern.permute.xlu0 0
    %186 = vperm.xlu0 %185, %v181
    %v187 = vpop.permute.xlu0 %186
    %188 = vset.pattern.permute.xlu0 0
    %189 = vperm.xlu0 %188, %v182
    %v190 = vpop.permute.xlu0 %189
    %v191 = vlaneseq
    %v192 = vshrl.u32 %v191, 7
    %v193 = vsub.s32 %v97, %v192
    %v194 = vrot.slane %v187, %v193
    %v195 = vlaneseq
    %v196 = vshrl.u32 %v195, 7
    %v197 = vsub.s32 %v97, %v196
    %v198 = vrot.slane %v190, %v197
    %v199 = vsel %vm106, %v198, %v194
    %201 = vst.msk [vmem:[#allocation9] sm:$0x3] %vm109, %v199
    // Predicated region
    $region22: #{tpu_custom_call.1} parent=1 // pred_check
      _
    $region23: #{tpu_custom_call.1} parent=1 // pred_check_branch
      %203 = sbr.rel (0) target = $region25
    $region24: #{tpu_custom_call.1} parent=1 // pred_region
      %s205 = ssub.s32 32, 32
      %206 = vsyncadd [#allocation6], %s205
      %s208 = sshll.u32 [#allocation9], 4
      %s209 = int_to_ptr.vmem [resolvable:$true] %s208
      %211 = dma.vmem_to_hbm [thread:$0]  %s209, 32, %s2, [#allocation6]
    $region25: #{tpu_custom_call.1} parent=1 // pred_fallthru
      _
    // Predicated region
    $region26: #{tpu_custom_call.1} parent=1 // pred_check
      _
    $region27: #{tpu_custom_call.1} parent=1 // pred_check_branch
      %213 = sbr.rel (0) target = $region29
    $region28: #{tpu_custom_call.1} parent=1 // pred_region
      _
    $region29: #{tpu_custom_call.1} parent=1 // pred_fallthru
      _
    // Predicated region
    $region30: #{tpu_custom_call.1} parent=1 // pred_check
      _
    $region31: #{tpu_custom_call.1} parent=1 // pred_check_branch
      %215 = sbr.rel (0) target = $region33
    $region32: #{tpu_custom_call.1} parent=1 // pred_region
      _
    $region33: #{tpu_custom_call.1} parent=1 // pred_fallthru
      _
    // Predicated region
    $region34: #{tpu_custom_call.1} parent=1 // pred_check
      _
    $region35: #{tpu_custom_call.1} parent=1 // pred_check_branch
      %217 = sbr.rel (0) target = $region37
    $region36: #{tpu_custom_call.1} parent=1 // pred_region
      %218 = dma.done [#allocation6], 32
    $region37: #{tpu_custom_call.1} parent=1 // pred_fallthru
      _
    // Predicated region
    $region38: #{tpu_custom_call.1} parent=1 // pred_check
      _
    $region39: #{tpu_custom_call.1} parent=1 // pred_check_branch
      %220 = sbr.rel (0) target = $region41
    $region40: #{tpu_custom_call.1} parent=1 // pred_region
      _
    $region41: #{tpu_custom_call.1} parent=1 // pred_fallthru
      _
    // Predicated region
    $region42: #{tpu_custom_call.1} parent=1 // pred_check
      _
    $region43: #{tpu_custom_call.1} parent=1 // pred_check_branch
      %222 = sbr.rel (0) target = $region45
    $region44: #{tpu_custom_call.1} parent=1 // pred_region
      _
    $region45: #{tpu_custom_call.1} parent=1 // pred_fallthru
      _
    %223 = vsyncpa [#allocation5], 1
    %224 = vsyncpa [#allocation8], 1
    %225 = vsyncpa [#allocation6], 1

</llo_original>
